<compile_context>
chip_gen: v7x
topology: tpu7x:2x2x1
jax: 0.10.0
libtpu: 0.0.40
codegen_flags: <defaults>
</compile_context>

<pallas_src>
import functools

import jax
import jax.numpy as jnp
from jax.experimental import pallas as pl
from jax.experimental.pallas import tpu as pltpu


def _round_up(a, b):
    return ((a + b - 1) // b) * b


def _prenorm_linear_kernel(x_ref, g_ref, w_ref, b_ref, o_ref, xn_ref, *, eps):
    # Grid = (row tiles i [parallel], output-column tiles j [arbitrary]).
    # The normalized row tile is computed once per i (when j == 0) into the
    # VMEM scratch `xn_ref` and reused for every output-column tile j.
    @pl.when(pl.program_id(1) == 0)
    def _():
        x = x_ref[...].astype(jnp.float32)
        # One-pass biased variance: var = E[x^2] - mean^2.
        mean = jnp.mean(x, axis=-1, keepdims=True)
        mean_sq = jnp.mean(x * x, axis=-1, keepdims=True)
        var = mean_sq - mean * mean
        xn = (x - mean) * jax.lax.rsqrt(var + eps)
        xn = xn * g_ref[...].astype(jnp.float32)  # gain, broadcast over rows
        # Store in the weight dtype: bf16 weights -> bf16 x bf16 MXU inputs
        # with f32 accumulation; f32 weights keep full f32 parity.
        xn_ref[...] = xn.astype(xn_ref.dtype)

    # fn: Linear(dim -> dim_out) column tile on the MXU, f32 accumulate.
    y = jnp.dot(xn_ref[...], w_ref[...], preferred_element_type=jnp.float32)
    y = y + b_ref[...].astype(jnp.float32)
    o_ref[...] = y.astype(o_ref.dtype)


def prenorm_linear(x, g, w, b, *, tile_m=256, tile_n=256):
    """PreNorm(dim, Linear): x (B,S,D), g (D,), w (D,Dout), b (Dout,) -> (B,S,Dout)."""
    B, S, D = x.shape
    Dout = w.shape[1]
    M = B * S

    # eps matches the PyTorch module: 1e-5 for float32 inputs, 1e-3 otherwise.
    eps = 1e-5 if x.dtype == jnp.float32 else 1e-3

    # Row tiling: keep a multiple of the sublane packing of the I/O dtype
    # (8 rows for 32-bit, 16 for 16-bit) and pad the tail instead of asserting.
    row_mult = 8 if jnp.dtype(x.dtype).itemsize >= 4 else 16
    tm = min(tile_m, _round_up(M, row_mult))
    M_pad = _round_up(M, tm)

    # Output-column tiling: lane-dense tiles (multiple of 128) for real sizes,
    # or a single full-width block when Dout is small.
    if Dout <= tile_n:
        tn = Dout
        N_pad = Dout
    else:
        tn = tile_n
        N_pad = _round_up(Dout, tn)

    x2 = x.reshape(M, D)
    if M_pad != M:
        x2 = jnp.pad(x2, ((0, M_pad - M), (0, 0)))
    g2 = g.reshape(1, D)
    w2 = w
    b2 = b.reshape(1, Dout)
    if N_pad != Dout:
        w2 = jnp.pad(w2, ((0, 0), (0, N_pad - Dout)))
        b2 = jnp.pad(b2, ((0, 0), (0, N_pad - Dout)))

    kernel = functools.partial(_prenorm_linear_kernel, eps=eps)

    out2 = pl.pallas_call(
        kernel,
        out_shape=jax.ShapeDtypeStruct((M_pad, N_pad), x.dtype),
        grid_spec=pltpu.PrefetchScalarGridSpec(
            num_scalar_prefetch=0,
            grid=(M_pad // tm, N_pad // tn),
            in_specs=[
                pl.BlockSpec((tm, D), lambda i, j: (i, 0)),   # x rows (constant in j -> not re-fetched)
                pl.BlockSpec((1, D), lambda i, j: (0, 0)),    # g (grid-invariant, tiny)
                pl.BlockSpec((D, tn), lambda i, j: (0, j)),   # W column tile (pipelined)
                pl.BlockSpec((1, tn), lambda i, j: (0, j)),   # bias tile
            ],
            out_specs=pl.BlockSpec((tm, tn), lambda i, j: (i, j)),
            scratch_shapes=[pltpu.VMEM((tm, D), w.dtype)],    # normalized rows, reused over j
        ),
        compiler_params=pltpu.CompilerParams(
            dimension_semantics=("parallel", "arbitrary"),
            vmem_limit_bytes=48 * 1024 * 1024,
        ),
    )(x2, g2, w2, b2)

    out2 = out2[:M, :Dout]
    return out2.reshape(B, S, Dout)


def _reference(x, g, w, b):
    eps = 1e-5 if x.dtype == jnp.float32 else 1e-3
    xf = x.astype(jnp.float32)
    mean = jnp.mean(xf, axis=-1, keepdims=True)
    var = jnp.mean((xf - mean) ** 2, axis=-1, keepdims=True)
    xn = (xf - mean) * jax.lax.rsqrt(var + eps) * g.astype(jnp.float32)
    return (xn @ w.astype(jnp.float32) + b.astype(jnp.float32)).astype(x.dtype)


if __name__ == "__main__":
    key = jax.random.PRNGKey(0)

    # --- small smoke test (single tile) ------------------------------------
    B, S, D, Dout = 2, 8, 32, 32
    kx, kw, kb, kx2, kg2, kw2, kb2 = jax.random.split(key, 7)
    x = jax.random.normal(kx, (B, S, D), dtype=jnp.float32)
    # LayerNorm gain = ones (as in the module's __init__); Linear w/b synthetic.
    g = jnp.ones((D,), dtype=jnp.float32)
    w = jax.random.normal(kw, (D, Dout), dtype=jnp.float32) * (1.0 / D ** 0.5)
    b = jax.random.normal(kb, (Dout,), dtype=jnp.float32) * 0.01

    out = jax.block_until_ready(prenorm_linear(x, g, w, b))
    ref = _reference(x, g, w, b)
    assert out.shape == (B, S, Dout)
    assert jnp.allclose(out, ref, atol=1e-4, rtol=1e-4)

    # --- tiled path: multiple row tiles (with padded tail) and N tiles ------
    B2, S2, D2, Do2 = 2, 100, 128, 256
    x_b = jax.random.normal(kx2, (B2, S2, D2), dtype=jnp.float32)
    g_b = 1.0 + 0.1 * jax.random.normal(kg2, (D2,), dtype=jnp.float32)
    w_b = jax.random.normal(kw2, (D2, Do2), dtype=jnp.float32) * (1.0 / D2 ** 0.5)
    b_b = jax.random.normal(kb2, (Do2,), dtype=jnp.float32) * 0.01

    out_b = jax.block_until_ready(
        prenorm_linear(x_b, g_b, w_b, b_b, tile_m=64, tile_n=128))
    ref_b = _reference(x_b, g_b, w_b, b_b)
    assert out_b.shape == (B2, S2, Do2)
    assert jnp.allclose(out_b, ref_b, atol=1e-3, rtol=1e-3)

    print("KERNEL_OK")
</pallas_src>

<mosaic_0001>
module attributes {stable_mosaic.version = 11 : i64} {
  func.func @_prenorm_linear_kernel(%arg0: i32, %arg1: i32, %arg2: memref<16x32xf32, #tpu.memory_space<vmem>>, %arg3: memref<1x32xf32, #tpu.memory_space<vmem>>, %arg4: memref<32x32xf32, #tpu.memory_space<vmem>>, %arg5: memref<1x32xf32, #tpu.memory_space<vmem>>, %arg6: memref<16x32xf32, #tpu.memory_space<vmem>>, %arg7: memref<16x32xf32, #tpu.memory_space<vmem>>) attributes {dimension_semantics = [#tpu.dimension_semantics<parallel>, #tpu.dimension_semantics<arbitrary>], iteration_bounds = array<i64: 1, 1>, scalar_prefetch = 0 : i64, scratch_operands = 1 : i64, tpu.core_type = #tpu.core_type<tc>, window_params = [{transform_indices = @transform_0, window_bounds = array<i64: 16, 32>}, {pipeline_mode = #tpu.pipeline_mode<synchronous>, transform_indices = @transform_1, window_bounds = array<i64: 1, 32>}, {transform_indices = @transform_2, window_bounds = array<i64: 32, 32>}, {transform_indices = @transform_3, window_bounds = array<i64: 1, 32>}, {transform_indices = @transform_4, window_bounds = array<i64: 16, 32>}]} {
    %c0_i32 = arith.constant 0 : i32
    %0 = arith.cmpi eq, %arg1, %c0_i32 : i32
    %1 = arith.extui %0 : i1 to i32
    %c0_i32_0 = arith.constant 0 : i32
    %2 = arith.cmpi ne, %1, %c0_i32_0 : i32
    scf.if %2 {
      %c0_8 = arith.constant 0 : index
      %c0_9 = arith.constant 0 : index
      %10 = vector.load %arg2[%c0_8, %c0_9] : memref<16x32xf32, #tpu.memory_space<vmem>>, vector<16x32xf32>
      %cst_10 = arith.constant dense<0.000000e+00> : vector<16xf32>
      %11 = vector.multi_reduction <add>, %10, %cst_10 [1] : vector<16x32xf32> to vector<16xf32>
      %12 = vector.shape_cast %11 : vector<16xf32> to vector<16x1xf32>
      %cst_11 = arith.constant 3.200000e+01 : f32
      %13 = vector.broadcast %cst_11 : f32 to vector<16x1xf32>
      %14 = arith.divf %12, %13 : vector<16x1xf32>
      %15 = arith.mulf %10, %10 : vector<16x32xf32>
      %cst_12 = arith.constant dense<0.000000e+00> : vector<16xf32>
      %16 = vector.multi_reduction <add>, %15, %cst_12 [1] : vector<16x32xf32> to vector<16xf32>
      %17 = vector.shape_cast %16 : vector<16xf32> to vector<16x1xf32>
      %cst_13 = arith.constant 3.200000e+01 : f32
      %18 = vector.broadcast %cst_13 : f32 to vector<16x1xf32>
      %19 = arith.divf %17, %18 : vector<16x1xf32>
      %20 = arith.mulf %14, %14 : vector<16x1xf32>
      %21 = arith.subf %19, %20 : vector<16x1xf32>
      %22 = vector.broadcast %14 : vector<16x1xf32> to vector<16x32xf32>
      %23 = arith.subf %10, %22 : vector<16x32xf32>
      %cst_14 = arith.constant 9.99999974E-6 : f32
      %24 = vector.broadcast %cst_14 : f32 to vector<16x1xf32>
      %25 = arith.addf %21, %24 : vector<16x1xf32>
      %26 = math.rsqrt %25 : vector<16x1xf32>
      %27 = vector.broadcast %26 : vector<16x1xf32> to vector<16x32xf32>
      %28 = arith.mulf %23, %27 : vector<16x32xf32>
      %c0_15 = arith.constant 0 : index
      %c0_16 = arith.constant 0 : index
      %29 = vector.load %arg3[%c0_15, %c0_16] : memref<1x32xf32, #tpu.memory_space<vmem>>, vector<1x32xf32>
      %30 = vector.broadcast %29 : vector<1x32xf32> to vector<16x32xf32>
      %31 = arith.mulf %28, %30 : vector<16x32xf32>
      %c0_17 = arith.constant 0 : index
      %c0_18 = arith.constant 0 : index
      %32 = vector.load %arg7[%c0_17, %c0_18] : memref<16x32xf32, #tpu.memory_space<vmem>>, vector<16x32xf32>
      tpu.vector_store %arg7[%c0_17, %c0_18], %31 {strides = array<i32>} : memref<16x32xf32, #tpu.memory_space<vmem>>, vector<16x32xf32>,
    } else {
    }
    %c0 = arith.constant 0 : index
    %c0_1 = arith.constant 0 : index
    %3 = vector.load %arg7[%c0, %c0_1] : memref<16x32xf32, #tpu.memory_space<vmem>>, vector<16x32xf32>
    %c0_2 = arith.constant 0 : index
    %c0_3 = arith.constant 0 : index
    %4 = vector.load %arg4[%c0_2, %c0_3] : memref<32x32xf32, #tpu.memory_space<vmem>>, vector<32x32xf32>
    %cst = arith.constant dense<0.000000e+00> : vector<16x32xf32>
    %5 = tpu.matmul %3, %4, %cst {dimension_numbers = #tpu.dot_dimension_numbers<[1], [0], [0], [1], [0, 0, 1, 1], [], []>} : vector<16x32xf32>, vector<32x32xf32>, vector<16x32xf32> -> vector<16x32xf32>
    %c0_4 = arith.constant 0 : index
    %c0_5 = arith.constant 0 : index
    %6 = vector.load %arg5[%c0_4, %c0_5] : memref<1x32xf32, #tpu.memory_space<vmem>>, vector<1x32xf32>
    %7 = vector.broadcast %6 : vector<1x32xf32> to vector<16x32xf32>
    %8 = arith.addf %5, %7 : vector<16x32xf32>
    %c0_6 = arith.constant 0 : index
    %c0_7 = arith.constant 0 : index
    %9 = vector.load %arg6[%c0_6, %c0_7] : memref<16x32xf32, #tpu.memory_space<vmem>>, vector<16x32xf32>
    tpu.vector_store %arg6[%c0_6, %c0_7], %8 {strides = array<i32>} : memref<16x32xf32, #tpu.memory_space<vmem>>, vector<16x32xf32>,
    return
  }
  func.func @transform_0(%arg0: i32, %arg1: i32) -> (i32, i32) {
    %c0_i32 = arith.constant 0 : i32
    %c0_i32_0 = arith.constant 0 : i32
    return %arg0, %c0_i32 : i32, i32
  }
  func.func @transform_1(%arg0: i32, %arg1: i32) -> (i32, i32) {
    %c0_i32 = arith.constant 0 : i32
    %c0_i32_0 = arith.constant 0 : i32
    %c0_i32_1 = arith.constant 0 : i32
    return %c0_i32, %c0_i32_0 : i32, i32
  }
  func.func @transform_2(%arg0: i32, %arg1: i32) -> (i32, i32) {
    %c0_i32 = arith.constant 0 : i32
    %c0_i32_0 = arith.constant 0 : i32
    return %c0_i32, %arg1 : i32, i32
  }
  func.func @transform_3(%arg0: i32, %arg1: i32) -> (i32, i32) {
    %c0_i32 = arith.constant 0 : i32
    %c0_i32_0 = arith.constant 0 : i32
    return %c0_i32, %arg1 : i32, i32
  }
  func.func @transform_4(%arg0: i32, %arg1: i32) -> (i32, i32) {
    %c0_i32 = arith.constant 0 : i32
    return %arg0, %arg1 : i32, i32
  }
}

</mosaic_0001>

<llo_original>
// kernel: tpu_custom_call.1
$region0: #{tpu_custom_call.1}
  #allocation0 [shape = 'u32[]', space=smem, size = 0x4, offset = 0x4, fixed_abs, tag = 'smem constant byte address 0x4 - core index']
  #allocation1 [shape = 'u32[144,128]{1,0:T(1,128)}', space=vmem, size = 0x12000, scoped, tag = 'internal scratch']
  #allocation2 [shape = 'f32[16,32]{1,0:T(8,128)}', space=vmem, size = 0x2000, scoped, tag = 'scratch operand']
  %s0 = inlined_call_operand.hbm [shape: f32[16,32], index: 0, kind: input, shape index: {}]
  %s1 = inlined_call_operand.vmem [shape: f32[1,32], index: 1, kind: input, shape index: {}]
  %s2 = inlined_call_operand.hbm [shape: f32[32,32], index: 2, kind: input, shape index: {}]
  %s3 = inlined_call_operand.vmem [shape: f32[1,32], index: 3, kind: input, shape index: {}]
  %s4 = inlined_call_operand.hbm [shape: f32[16,32], index: 4, kind: output, shape index: {}]
  %s5 = sld [smem:[#allocation0]]
  $region38: #{tpu_custom_call.1} parent=0
    _
  %s7 = ssub.s32 1, %s5
  %s8 = scalar_select 0, %s7, %s5
  $region1: #{tpu_custom_call.1} parent=0
    #allocation3 [shape = 'u8[8192]{0}', space=vmem, size = 0x2000, scoped, tag = 'input window, operand 0, single buffered']
    #allocation4 [shape = 's32[1]{0}', space=sflag, size = 0x4, scoped, tag = 'scoped memory for tpu_custom_call.1']
    #allocation5 [shape = 's32[1]{0}', space=sflag, size = 0x4, scoped, tag = 'scoped memory for tpu_custom_call.1']
    #allocation6 [shape = 'u8[16384]{0}', space=vmem, size = 0x4000, scoped, tag = 'input window, operand 2, single buffered']
    #allocation7 [shape = 's32[1]{0}', space=sflag, size = 0x4, scoped, tag = 'scoped memory for tpu_custom_call.1']
    #allocation8 [shape = 'u8[8192]{0}', space=vmem, size = 0x2000, scoped, tag = 'output window, operand 0, single buffered']
    %9 = vsyncpa [#allocation4], 0
    %10 = vsyncpa [#allocation7], 0
    %11 = vsyncpa [#allocation5], 0
    // Predicated region
    $region2: #{tpu_custom_call.1} parent=1 // pred_check
      _
    $region3: #{tpu_custom_call.1} parent=1 // pred_check_branch
      %13 = sbr.rel (0) target = $region5
    $region4: #{tpu_custom_call.1} parent=1 // pred_region
      %s15 = ssub.s32 256, 256
      %16 = vsyncadd [#allocation4], %s15
      %s17 = sshll.u32 [#allocation3], 4
      %s18 = int_to_ptr.vmem [resolvable:$true] %s17
      %23 = dma.hbm_to_vmem [thread:$0]  %s0, 256, %s18, [#allocation4], 128, 128, 8
    $region5: #{tpu_custom_call.1} parent=1 // pred_fallthru
      _
    // Predicated region
    $region6: #{tpu_custom_call.1} parent=1 // pred_check
      _
    $region7: #{tpu_custom_call.1} parent=1 // pred_check_branch
      %25 = sbr.rel (0) target = $region9
    $region8: #{tpu_custom_call.1} parent=1 // pred_region
      _
    $region9: #{tpu_custom_call.1} parent=1 // pred_fallthru
      _
    // Predicated region
    $region10: #{tpu_custom_call.1} parent=1 // pred_check
      _
    $region11: #{tpu_custom_call.1} parent=1 // pred_check_branch
      %27 = sbr.rel (0) target = $region13
    $region12: #{tpu_custom_call.1} parent=1 // pred_region
      %s29 = ssub.s32 512, 512
      %30 = vsyncadd [#allocation7], %s29
      %s31 = sshll.u32 [#allocation6], 4
      %s32 = int_to_ptr.vmem [resolvable:$true] %s31
      %37 = dma.hbm_to_vmem [thread:$0]  %s2, 512, %s32, [#allocation7], 128, 128, 8
    $region13: #{tpu_custom_call.1} parent=1 // pred_fallthru
      _
    // Predicated region
    $region14: #{tpu_custom_call.1} parent=1 // pred_check
      _
    $region15: #{tpu_custom_call.1} parent=1 // pred_check_branch
      %39 = sbr.rel (0) target = $region17
    $region16: #{tpu_custom_call.1} parent=1 // pred_region
      _
    $region17: #{tpu_custom_call.1} parent=1 // pred_fallthru
      _
    // Predicated region
    $region18: #{tpu_custom_call.1} parent=1 // pred_check
      _
    $region19: #{tpu_custom_call.1} parent=1 // pred_check_branch
      %41 = sbr.rel (0) target = $region21
    $region20: #{tpu_custom_call.1} parent=1 // pred_region
      %42 = dma.done [#allocation4], 256
    $region21: #{tpu_custom_call.1} parent=1 // pred_fallthru
      _
    // Predicated region
    $region22: #{tpu_custom_call.1} parent=1 // pred_check
      _
    $region23: #{tpu_custom_call.1} parent=1 // pred_check_branch
      %44 = sbr.rel (0) target = $region25
    $region24: #{tpu_custom_call.1} parent=1 // pred_region
      %45 = dma.done [#allocation7], 512
    $region25: #{tpu_custom_call.1} parent=1 // pred_fallthru
      _
    %p46 = scmp.eq.s32.totalorder 0, 0
    // Predicated region
    $region26: #{tpu_custom_call.1} parent=1 // pred_check
      %p47 = pneg %p46
    $region27: #{tpu_custom_call.1} parent=1 // pred_check_branch
      %49 = sbr.rel (%p47) target = $region29
    $region28: #{tpu_custom_call.1} parent=1 // pred_region
      %v50 = vld [vmem:[#allocation3] sm:$0xff]
      %v51 = vld [vmem:[#allocation3 + $0x8] sm:$0xff]
      %vm52 = vcmask 261120
      %v53 = vsel %vm52, %v50, 0.0
      %54 = vadd.xlane.f32.xlu0 %v53
      %v55 = vpop.xlane.xlu0 %54
      %v56 = vsel %vm52, %v51, 0.0
      %57 = vadd.xlane.f32.xlu0 %v56
      %v58 = vpop.xlane.xlu0 %57
      %v59 = vrcp.pop 32.0
      %v60 = vmul.f32 %v55, %v59
      %v61 = vmul.f32 %v58, %v59
      %v62 = vmul.f32 %v50, %v50
      %v63 = vmul.f32 %v51, %v51
      %v64 = vsel %vm52, %v62, 0.0
      %65 = vadd.xlane.f32.xlu0 %v64
      %v66 = vpop.xlane.xlu0 %65
      %v67 = vsel %vm52, %v63, 0.0
      %68 = vadd.xlane.f32.xlu0 %v67
      %v69 = vpop.xlane.xlu0 %68
      %v70 = vmul.f32 %v66, %v59
      %v71 = vmul.f32 %v69, %v59
      %v72 = vmul.f32 %v60, %v60
      %v73 = vmul.f32 %v61, %v61
      %v74 = vsub.f32 %v70, %v72
      %v75 = vsub.f32 %v71, %v73
      %v76 = vsub.f32 %v50, %v60
      %v77 = vsub.f32 %v51, %v61
      %v78 = vadd.f32 %v74, 1e-05
      %v79 = vadd.f32 %v75, 1e-05
      %v80 = vrsqrt.pop %v78
      %v81 = vrsqrt.pop %v79
      %v82 = vmul.f32 %v76, %v80
      %v83 = vmul.f32 %v77, %v81
      %v84 = vld [vmem:[%s1] sm:$0x1]
      %v86 = vlaneseq
      %v87 = vshrl.u32 %v86, 7
      %v88 = vsub.s32 0, %v87
      %v89 = vrot.slane %v84, %v88
      %v91 = vmul.f32 %v82, %v89
      %v92 = vmul.f32 %v83, %v89
      %93 = vst.msk [vmem:[#allocation2] sm:$0xff] %vm52, %v91
      %94 = vst.msk [vmem:[#allocation2 + $0x8] sm:$0xff] %vm52, %v92
    $region29: #{tpu_custom_call.1} parent=1 // pred_fallthru
      _
    %v95 = vld [vmem:[#allocation2] sm:$0xff]
    %v96 = vld [vmem:[#allocation2 + $0x8] sm:$0xff]
    %v97 = vld [vmem:[#allocation6] sm:$0xff]
    %v98 = vld [vmem:[#allocation6 + $0x8] sm:$0xff]
    %v99 = vld [vmem:[#allocation6 + $0x10] sm:$0xff]
    %v100 = vld [vmem:[#allocation6 + $0x18] sm:$0xff]
    %v101 = vld [vmem:[%s3] sm:$0x1]
    %v103 = vlaneseq
    %v104 = vshrl.u32 %v103, 7
    %v105 = vsub.s32 0, %v104
    %v106 = vrot.slane %v101, %v105
    %vm108 = vcmask 261120
    %v110 = vsel %vm108, %v95, 0
    %v113 = vsel %vm108, %v96, 0
    %115 = vmatprep.subr.mxu0 0.0
    %116 = vmatpush1.msra.mxu0 %v97
    %117 = vmatprep.subr.mxu0 0.0
    %118 = vmatpush1.msra.mxu0 %v98
    %119 = vmatprep.subr.mxu0 0.0
    %120 = vmatpush1.msra.mxu0 %v99
    %121 = vmatprep.subr.mxu0 0.0
    %122 = vmatpush1.msra.mxu0 %v100
    %123 = vmatprep.subr.mxu0 0.0
    %124 = vmatpush1.msra.mxu0 0.0
    %125 = vmatprep.subr.mxu0 0.0
    %126 = vmatpush1.msra.mxu0 0.0
    %127 = vmatprep.subr.mxu0 0.0
    %128 = vmatpush1.msra.mxu0 0.0
    %129 = vmatprep.subr.mxu0 0.0
    %130 = vmatpush1.msra.mxu0 0.0
    %131 = vmatprep.subr.mxu0 0.0
    %132 = vmatpush1.msra.mxu0 0.0
    %133 = vmatprep.subr.mxu0 0.0
    %134 = vmatpush1.msra.mxu0 0.0
    %135 = vmatprep.subr.mxu0 0.0
    %136 = vmatpush1.msra.mxu0 0.0
    %137 = vmatprep.subr.mxu0 0.0
    %138 = vmatpush1.msra.mxu0 0.0
    %139 = vmatprep.subr.mxu0 0.0
    %140 = vmatpush1.msra.mxu0 0.0
    %141 = vmatprep.subr.mxu0 0.0
    %142 = vmatpush1.msra.mxu0 0.0
    %143 = vmatprep.subr.mxu0 0.0
    %144 = vmatpush1.msra.mxu0 0.0
    %145 = vmatprep.subr.mxu0 0.0
    %146 = vmatpush1.msra.mxu0 0.0
    %147 = vmatprep.subr.mxu0 0.0
    %148 = vmatpush1.msra.mxu0 0.0
    %149 = vmatprep.subr.mxu0 0.0
    %150 = vmatpush1.msra.mxu0 0.0
    %151 = vmatprep.subr.mxu0 0.0
    %152 = vmatpush1.msra.mxu0 0.0
    %153 = vmatprep.subr.mxu0 0.0
    %154 = vmatpush1.msra.mxu0 0.0
    %155 = vmatprep.subr.mxu0 0.0
    %156 = vmatpush1.msra.mxu0 0.0
    %157 = vmatprep.subr.mxu0 0.0
    %158 = vmatpush1.msra.mxu0 0.0
    %159 = vmatprep.subr.mxu0 0.0
    %160 = vmatpush1.msra.mxu0 0.0
    %161 = vmatprep.subr.mxu0 0.0
    %162 = vmatpush1.msra.mxu0 0.0
    %163 = vmatprep.subr.mxu0 0.0
    %164 = vmatpush1.msra.mxu0 0.0
    %165 = vmatprep.subr.mxu0 0.0
    %166 = vmatpush1.msra.mxu0 0.0
    %167 = vmatprep.subr.mxu0 0.0
    %168 = vmatpush1.msra.mxu0 0.0
    %169 = vmatprep.subr.mxu0 0.0
    %170 = vmatpush1.msra.mxu0 0.0
    %171 = vmatprep.subr.mxu0 0.0
    %172 = vmatpush1.msra.mxu0 0.0
    %173 = vmatprep.subr.mxu0 0.0
    %174 = vmatpush1.msra.mxu0 0.0
    %175 = vmatprep.subr.mxu0 0.0
    %176 = vmatpush1.msra.mxu0 0.0
    %177 = vmatprep.subr.mxu0 0.0
    %178 = vmatpush1.msra.mxu0 0.0
    %179 = vmatprep.mubr.f32.mxu0 0.0
    %180 = vmatmul.mubr.f32.gmra.mrb[0].mxu0 %v110
    %v181 = vpop.f32.mrb[0].mxu0
    %v182 = vadd.f32 %v106, %v181
    %v183 = vpop.f32.mrb[0].mxu0
    %184 = vmatprep.mubr.f32.mxu0 0.0
    %185 = vmatmul.mubr.f32.gmra.mrb[0].mxu0 %v113
    %v186 = vpop.f32.mrb[0].mxu0
    %v187 = vadd.f32 %v106, %v186
    %v188 = vpop.f32.mrb[0].mxu0
    %189 = vdwg.mxu0
    %190 = vst.msk [vmem:[#allocation8] sm:$0xff] %vm108, %v182
    %191 = vst.msk [vmem:[#allocation8 + $0x8] sm:$0xff] %vm108, %v187
    // Predicated region
    $region30: #{tpu_custom_call.1} parent=1 // pred_check
      _
    $region31: #{tpu_custom_call.1} parent=1 // pred_check_branch
      %193 = sbr.rel (0) target = $region33
    $region32: #{tpu_custom_call.1} parent=1 // pred_region
      %s195 = ssub.s32 256, 256
      %196 = vsyncadd [#allocation5], %s195
      %s197 = sshll.u32 [#allocation8], 4
      %s198 = int_to_ptr.vmem [resolvable:$true] %s197
      %203 = dma.vmem_to_hbm [thread:$0]  %s198, 256, %s4, [#allocation5], 128, 128, 8
    $region33: #{tpu_custom_call.1} parent=1 // pred_fallthru
      _
    // Predicated region
    $region34: #{tpu_custom_call.1} parent=1 // pred_check
      _
    $region35: #{tpu_custom_call.1} parent=1 // pred_check_branch
      %205 = sbr.rel (0) target = $region37
    $region36: #{tpu_custom_call.1} parent=1 // pred_region
      %206 = dma.done [#allocation5], 256
    $region37: #{tpu_custom_call.1} parent=1 // pred_fallthru
      _
    %207 = vsyncpa [#allocation4], 1
    %208 = vsyncpa [#allocation7], 1
    %209 = vsyncpa [#allocation5], 1

</llo_original>
